<compile_context>
chip_gen: v7x
topology: tpu7x:2x2x1
jax: 0.10.0
libtpu: 0.0.40
codegen_flags: <defaults>
</compile_context>

<pallas_src>
from functools import partial

import jax
import jax.numpy as jnp
import numpy as np
from jax.experimental import pallas as pl
from jax.experimental.pallas import tpu as pltpu

_NEG_INF = -1e10


# --------------------------- fused forward kernel -----------------------------------
def _linear_assignment_kernel(*refs, deterministic, has_mask):
    """Lane-dense layout:
         sublanes (axis 0): D = num_actions       (reduction axis)
         lanes    (axis 1): TN columns, one per (batch, agent) pair
    """
    i = 0
    x = refs[i][...].astype(jnp.float32); i += 1                    # (D, TN)
    if has_mask:
        avail = refs[i][...]; i += 1                                # (D, TN) bf16 {0,1}
        logits = jnp.where(avail > 0, x, jnp.float32(_NEG_INF))
    else:
        logits = x
    if not deterministic:
        u = refs[i][...]; i += 1                                    # (1, TN) in [0, 1)
    act_ref, lp_ref = refs[i], refs[i + 1]                          # (1, TN) each

    D = logits.shape[0]
    row = jax.lax.broadcasted_iota(jnp.int32, logits.shape, dimension=0)

    # Only the log-softmax pieces we actually need (no full (D,TN) logp tensor).
    m = jnp.max(logits, axis=0, keepdims=True)                      # (1, TN)
    e = jnp.exp(logits - m)                                         # (D, TN)
    sum_e = jnp.sum(e, axis=0, keepdims=True)                       # (1, TN)

    if deterministic:
        # first index attaining the maximum (matches torch.argmax / jnp.argmax)
        action = jnp.min(jnp.where(logits >= m, row, D), axis=0, keepdims=True)
        sel_logit = m                                               # logits[action] == max
    else:
        # Inverse-CDF categorical sampling with one uniform per column.
        # Inclusive prefix-sum over the small action axis via a lower-triangular
        # matmul (the MXU is otherwise idle, so this is effectively free).
        tri = (jax.lax.broadcasted_iota(jnp.int32, (D, D), 0) >=
               jax.lax.broadcasted_iota(jnp.int32, (D, D), 1)).astype(jnp.float32)
        cdf = jnp.dot(tri, e, preferred_element_type=jnp.float32)   # (D, TN)
        thr = u * sum_e                                             # (1, TN)
        raw = jnp.min(jnp.where(cdf > thr, row, D), axis=0, keepdims=True)
        # Numerical fallback: if rounding made the threshold unreachable, take the
        # last action with non-zero probability (always an available action).
        last_ok = jnp.max(jnp.where(e > 0, row, -1), axis=0, keepdims=True)
        action = jnp.minimum(raw, last_ok)
        sel_logit = jnp.sum(jnp.where(row == action, logits, 0.0),
                            axis=0, keepdims=True)

    act_ref[...] = action                                           # (1, TN) i32
    # log_prob(action) = logits[action] - logsumexp(logits)
    lp_ref[...] = sel_logit - (m + jnp.log(sum_e))                  # (1, TN) f32


# ------------------------------------ wrapper ----------------------------------------
def linear_assignment_forward(x, available_actions=None, deterministic=False,
                              rng=None, stream_bf16=False):
    """x: (B, num_agents, num_actions).
    Returns (actions: (B, num_agents, 1) int32, action_log_probs: (B, 1) float32)."""
    x = jnp.asarray(x, jnp.float32)
    B, A, D = x.shape
    N = B * A

    # Lane-dense layout: actions on sublanes, the B*A columns on lanes.
    x_t = x.reshape(N, D).T                                         # (D, N)
    if stream_bf16:
        x_t = x_t.astype(jnp.bfloat16)      # halves HBM traffic; kernel upcasts to f32

    has_mask = available_actions is not None
    if has_mask:
        avail = jnp.broadcast_to(jnp.asarray(available_actions), (B, A, D))
        avail_t = (avail != 0).reshape(N, D).T.astype(jnp.bfloat16)  # narrow mask dtype

    # Tile the lane axis once it is worth pipelining; each step moves a lane-dense
    # (D, TN) block and the grid axis is "parallel" (v7x megacore friendly).
    if N > 1024:
        TN = 512
        N_pad = pl.cdiv(N, TN) * TN
    else:
        TN, N_pad = N, N
    pad = N_pad - N
    if pad:
        x_t = jnp.pad(x_t, ((0, 0), (0, pad)))
        if has_mask:
            avail_t = jnp.pad(avail_t, ((0, 0), (0, pad)))

    inputs = [x_t]
    in_specs = [pl.BlockSpec((D, TN), lambda i: (0, i))]
    if has_mask:
        inputs.append(avail_t)
        in_specs.append(pl.BlockSpec((D, TN), lambda i: (0, i)))
    if not deterministic:
        if rng is None:
            rng = jax.random.PRNGKey(0)
        u = jax.random.uniform(rng, (1, N_pad), jnp.float32)        # one uniform / column
        inputs.append(u)
        in_specs.append(pl.BlockSpec((1, TN), lambda i: (0, i)))

    act_row, lp_row = pl.pallas_call(
        partial(_linear_assignment_kernel,
                deterministic=deterministic, has_mask=has_mask),
        out_shape=(jax.ShapeDtypeStruct((1, N_pad), jnp.int32),
                   jax.ShapeDtypeStruct((1, N_pad), jnp.float32)),
        grid=(N_pad // TN,),
        in_specs=in_specs,
        out_specs=(pl.BlockSpec((1, TN), lambda i: (0, i)),
                   pl.BlockSpec((1, TN), lambda i: (0, i))),
        compiler_params=pltpu.CompilerParams(
            dimension_semantics=("parallel",),
            vmem_limit_bytes=32 * 1024 * 1024),
    )(*inputs)

    actions = act_row[0, :N].reshape(B, A)[..., None]
    # per-batch agent-sum: a tiny (B, A) reduction, cheaper outside the kernel than
    # a cross-lane segmented reduction inside it.
    log_probs = lp_row[0, :N].reshape(B, A).sum(axis=-1, keepdims=True)
    return actions, log_probs


# ------------------------------ pure-JAX reference -----------------------------------
def reference_forward(x, available_actions=None):
    logits = x if available_actions is None else jnp.where(available_actions > 0, x, _NEG_INF)
    logp = jax.nn.log_softmax(logits, axis=-1)
    action = jnp.argmax(logits, axis=-1)                                  # (B, A)
    alp = jnp.take_along_axis(logp, action[..., None], axis=-1)[..., 0]   # (B, A)
    return action[..., None].astype(jnp.int32), jnp.sum(alp, axis=-1, keepdims=True)


if __name__ == "__main__":
    B, A, D = 2, 16, 16   # batch, num_agents, num_actions (= x.shape[-1])
    key = jax.random.PRNGKey(0)
    kx, km, ks = jax.random.split(key, 3)
    x = jax.random.normal(kx, (B, A, D), jnp.float32)
    avail = jax.random.bernoulli(km, 0.7, (B, A, D))
    avail = avail.at[..., 0].set(True)        # keep at least one action available
    avail_f = avail.astype(jnp.float32)

    # deterministic path (mode) — checked against the pure-JAX reference
    act, lp = linear_assignment_forward(x, avail_f, deterministic=True)
    jax.block_until_ready((act, lp))
    ref_act, ref_lp = reference_forward(x, avail_f)
    assert act.shape == (B, A, 1) and lp.shape == (B, 1)
    np.testing.assert_array_equal(np.asarray(act), np.asarray(ref_act))
    np.testing.assert_allclose(np.asarray(lp), np.asarray(ref_lp), rtol=1e-5, atol=1e-4)

    # mask-free deterministic variant (separately compiled kernel, no ones-mask DMA)
    act_nm, lp_nm = linear_assignment_forward(x, None, deterministic=True)
    jax.block_until_ready((act_nm, lp_nm))
    ref_act_nm, ref_lp_nm = reference_forward(x, None)
    np.testing.assert_array_equal(np.asarray(act_nm), np.asarray(ref_act_nm))
    np.testing.assert_allclose(np.asarray(lp_nm), np.asarray(ref_lp_nm), rtol=1e-5, atol=1e-4)

    # stochastic path (inverse-CDF categorical sample, one uniform per (batch, agent))
    s_act, s_lp = linear_assignment_forward(x, avail_f, deterministic=False, rng=ks)
    jax.block_until_ready((s_act, s_lp))
    s_act_np = np.asarray(s_act)[..., 0]
    assert ((s_act_np >= 0) & (s_act_np < D)).all()
    chosen_avail = np.take_along_axis(np.asarray(avail_f), s_act_np[..., None], axis=-1)
    assert (chosen_avail > 0).all()           # sampled actions must be available
    # reported log-probs must equal log_softmax of the masked logits at the samples
    masked = np.where(np.asarray(avail_f) > 0, np.asarray(x), _NEG_INF)
    logp_ref = np.asarray(jax.nn.log_softmax(jnp.asarray(masked), axis=-1))
    ref_s_lp = np.take_along_axis(logp_ref, s_act_np[..., None], axis=-1)[..., 0].sum(
        axis=-1, keepdims=True)
    np.testing.assert_allclose(np.asarray(s_lp), ref_s_lp, rtol=1e-5, atol=1e-4)

    print("KERNEL_OK")
</pallas_src>

<mosaic_0001>
module attributes {stable_mosaic.version = 11 : i64} {
  func.func @_linear_assignment_kernel(%arg0: i32, %arg1: memref<16x32xf32, #tpu.memory_space<vmem>>, %arg2: memref<16x32xbf16, #tpu.memory_space<vmem>>, %arg3: memref<1x32xi32, #tpu.memory_space<vmem>>, %arg4: memref<1x32xf32, #tpu.memory_space<vmem>>) attributes {dimension_semantics = [#tpu.dimension_semantics<parallel>], iteration_bounds = array<i64: 1>, scalar_prefetch = 0 : i64, scratch_operands = 0 : i64, tpu.core_type = #tpu.core_type<tc>, window_params = [{transform_indices = @transform_0, window_bounds = array<i64: 16, 32>}, {transform_indices = @transform_1, window_bounds = array<i64: 16, 32>}, {transform_indices = @transform_2, window_bounds = array<i64: 1, 32>}, {transform_indices = @transform_3, window_bounds = array<i64: 1, 32>}]} {
    %c0 = arith.constant 0 : index
    %c0_0 = arith.constant 0 : index
    %0 = vector.load %arg1[%c0, %c0_0] : memref<16x32xf32, #tpu.memory_space<vmem>>, vector<16x32xf32>
    %c0_1 = arith.constant 0 : index
    %c0_2 = arith.constant 0 : index
    %1 = vector.load %arg2[%c0_1, %c0_2] : memref<16x32xbf16, #tpu.memory_space<vmem>>, vector<16x32xbf16>
    %cst = arith.constant 0.000000e+00 : bf16
    %2 = vector.broadcast %cst : bf16 to vector<16x32xbf16>
    %3 = arith.cmpf ogt, %1, %2 : vector<16x32xbf16>
    %cst_3 = arith.constant -1.000000e+10 : f32
    %4 = vector.broadcast %cst_3 : f32 to vector<16x32xf32>
    %5 = arith.select %3, %0, %4 : vector<16x32xi1>, vector<16x32xf32>
    %6 = tpu.iota {dimensions = array<i32: 0>} : vector<16x32xi32>
    %cst_4 = arith.constant dense<0xFF800000> : vector<32xf32>
    %7 = vector.multi_reduction <maximumf>, %5, %cst_4 [0] : vector<16x32xf32> to vector<32xf32>
    %8 = vector.shape_cast %7 : vector<32xf32> to vector<1x32xf32>
    %9 = vector.broadcast %8 : vector<1x32xf32> to vector<16x32xf32>
    %10 = arith.subf %5, %9 : vector<16x32xf32>
    %11 = math.exp %10 : vector<16x32xf32>
    %cst_5 = arith.constant dense<0.000000e+00> : vector<32xf32>
    %12 = vector.multi_reduction <add>, %11, %cst_5 [0] : vector<16x32xf32> to vector<32xf32>
    %13 = vector.shape_cast %12 : vector<32xf32> to vector<1x32xf32>
    %14 = vector.broadcast %8 : vector<1x32xf32> to vector<16x32xf32>
    %15 = arith.cmpf oge, %5, %14 : vector<16x32xf32>
    %c16_i32 = arith.constant 16 : i32
    %16 = vector.broadcast %c16_i32 : i32 to vector<16x32xi32>
    %17 = arith.select %15, %6, %16 : vector<16x32xi1>, vector<16x32xi32>
    %cst_6 = arith.constant dense<2147483647> : vector<32xi32>
    %18 = vector.multi_reduction <minsi>, %17, %cst_6 [0] : vector<16x32xi32> to vector<32xi32>
    %19 = vector.shape_cast %18 : vector<32xi32> to vector<1x32xi32>
    %c0_7 = arith.constant 0 : index
    %c0_8 = arith.constant 0 : index
    %20 = vector.load %arg3[%c0_7, %c0_8] : memref<1x32xi32, #tpu.memory_space<vmem>>, vector<1x32xi32>
    tpu.vector_store %arg3[%c0_7, %c0_8], %19 {strides = array<i32>} : memref<1x32xi32, #tpu.memory_space<vmem>>, vector<1x32xi32>,
    %21 = math.log %13 : vector<1x32xf32>
    %22 = arith.addf %8, %21 : vector<1x32xf32>
    %23 = arith.subf %8, %22 : vector<1x32xf32>
    %c0_9 = arith.constant 0 : index
    %c0_10 = arith.constant 0 : index
    %24 = vector.load %arg4[%c0_9, %c0_10] : memref<1x32xf32, #tpu.memory_space<vmem>>, vector<1x32xf32>
    tpu.vector_store %arg4[%c0_9, %c0_10], %23 {strides = array<i32>} : memref<1x32xf32, #tpu.memory_space<vmem>>, vector<1x32xf32>,
    return
  }
  func.func @transform_0(%arg0: i32) -> (i32, i32) {
    %c0_i32 = arith.constant 0 : i32
    %c0_i32_0 = arith.constant 0 : i32
    return %c0_i32, %arg0 : i32, i32
  }
  func.func @transform_1(%arg0: i32) -> (i32, i32) {
    %c0_i32 = arith.constant 0 : i32
    %c0_i32_0 = arith.constant 0 : i32
    return %c0_i32, %arg0 : i32, i32
  }
  func.func @transform_2(%arg0: i32) -> (i32, i32) {
    %c0_i32 = arith.constant 0 : i32
    %c0_i32_0 = arith.constant 0 : i32
    return %c0_i32, %arg0 : i32, i32
  }
  func.func @transform_3(%arg0: i32) -> (i32, i32) {
    %c0_i32 = arith.constant 0 : i32
    %c0_i32_0 = arith.constant 0 : i32
    return %c0_i32, %arg0 : i32, i32
  }
}

</mosaic_0001>

<llo_original>
// kernel: tpu_custom_call.1
$region0: #{tpu_custom_call.1}
  #allocation0 [shape = 'u32[]', space=smem, size = 0x4, offset = 0x4, fixed_abs, tag = 'smem constant byte address 0x4 - core index']
  #allocation1 [shape = 'u32[144,128]{1,0:T(1,128)}', space=vmem, size = 0x12000, scoped, tag = 'internal scratch']
  %s0 = inlined_call_operand.hbm [shape: f32[16,32], index: 0, kind: input, shape index: {}]
  %s1 = inlined_call_operand.hbm [shape: bf16[16,32], index: 1, kind: input, shape index: {}]
  %s2 = inlined_call_operand.hbm [shape: s32[1,32], index: 2, kind: output, shape index: {0}]
  %s3 = inlined_call_operand.hbm [shape: f32[1,32], index: 3, kind: output, shape index: {1}]
  %4 = xla_tuple %s2, %s3
  %s5 = sld [smem:[#allocation0]]
  $region34: #{tpu_custom_call.1} parent=0
    _
  %s7 = ssub.s32 1, %s5
  %s8 = scalar_select 0, %s7, %s5
  $region1: #{tpu_custom_call.1} parent=0
    #allocation2 [shape = 'u8[8192]{0}', space=vmem, size = 0x2000, scoped, tag = 'input window, operand 0, single buffered']
    #allocation3 [shape = 's32[1]{0}', space=sflag, size = 0x4, scoped, tag = 'scoped memory for tpu_custom_call.1']
    #allocation4 [shape = 's32[1]{0}', space=sflag, size = 0x4, scoped, tag = 'scoped memory for tpu_custom_call.1']
    #allocation5 [shape = 'u8[4096]{0}', space=vmem, size = 0x1000, scoped, tag = 'input window, operand 1, single buffered']
    #allocation6 [shape = 's32[1]{0}', space=sflag, size = 0x4, scoped, tag = 'scoped memory for tpu_custom_call.1']
    #allocation7 [shape = 'u8[512]{0}', space=vmem, size = 0x400, scoped, tag = 'output window, operand 0, single buffered']
    #allocation8 [shape = 'u8[512]{0}', space=vmem, size = 0x400, scoped, tag = 'output window, operand 1, single buffered']
    #allocation9 [shape = 's32[1]{0}', space=sflag, size = 0x4, scoped, tag = 'scoped memory for tpu_custom_call.1']
    %9 = vsyncpa [#allocation3], 0
    %10 = vsyncpa [#allocation6], 0
    %11 = vsyncpa [#allocation4], 0
    %12 = vsyncpa [#allocation9], 0
    // Predicated region
    $region2: #{tpu_custom_call.1} parent=1 // pred_check
      _
    $region3: #{tpu_custom_call.1} parent=1 // pred_check_branch
      %14 = sbr.rel (0) target = $region5
    $region4: #{tpu_custom_call.1} parent=1 // pred_region
      %s16 = ssub.s32 256, 256
      %17 = vsyncadd [#allocation3], %s16
      %s18 = sshll.u32 [#allocation2], 4
      %s19 = int_to_ptr.vmem [resolvable:$true] %s18
      %24 = dma.hbm_to_vmem [thread:$0]  %s0, 256, %s19, [#allocation3], 128, 128, 8
    $region5: #{tpu_custom_call.1} parent=1 // pred_fallthru
      _
    // Predicated region
    $region6: #{tpu_custom_call.1} parent=1 // pred_check
      _
    $region7: #{tpu_custom_call.1} parent=1 // pred_check_branch
      %26 = sbr.rel (0) target = $region9
    $region8: #{tpu_custom_call.1} parent=1 // pred_region
      %s28 = ssub.s32 128, 128
      %29 = vsyncadd [#allocation6], %s28
      %s30 = sshll.u32 [#allocation5], 4
      %s31 = int_to_ptr.vmem [resolvable:$true] %s30
      %36 = dma.hbm_to_vmem [thread:$0]  %s1, 128, %s31, [#allocation6], 64, 64, 4
    $region9: #{tpu_custom_call.1} parent=1 // pred_fallthru
      _
    // Predicated region
    $region10: #{tpu_custom_call.1} parent=1 // pred_check
      _
    $region11: #{tpu_custom_call.1} parent=1 // pred_check_branch
      %38 = sbr.rel (0) target = $region13
    $region12: #{tpu_custom_call.1} parent=1 // pred_region
      %39 = dma.done [#allocation3], 256
    $region13: #{tpu_custom_call.1} parent=1 // pred_fallthru
      _
    // Predicated region
    $region14: #{tpu_custom_call.1} parent=1 // pred_check
      _
    $region15: #{tpu_custom_call.1} parent=1 // pred_check_branch
      %41 = sbr.rel (0) target = $region17
    $region16: #{tpu_custom_call.1} parent=1 // pred_region
      %42 = dma.done [#allocation6], 128
    $region17: #{tpu_custom_call.1} parent=1 // pred_fallthru
      _
    %v46 = vld [vmem:[#allocation2] sm:$0xff]
    %v47 = vld [vmem:[#allocation2 + $0x8] sm:$0xff]
    %v48 = vld [vmem:[#allocation5] sm:$0xf]
    %v49 = vld [vmem:[#allocation5 + $0x4] sm:$0xf]
    %vm50 = vcmp.gt.bf16.partialorder %v48, 0
    %vm51 = vcmp.gt.bf16.partialorder %v49, 0
    %v52 = vsel %vm50, 65537, 0
    %v53 = vsel %vm51, 65537, 0
    %v54 = vunpack.c.l.b16 %v52
    %v55 = vunpack.c.l.b16 %v53
    %vm56 = vcmp.ne.s32.totalorder %v54, 0
    %vm57 = vcmp.ne.s32.totalorder %v55, 0
    %v58 = vsel %vm56, %v46, -1e+10
    %v59 = vsel %vm57, %v47, -1e+10
    %v60 = vlaneseq
    %v61 = vshrl.u32 %v60, 7
    %v62 = vadd.s32 %v61, 8
    %vm63 = vcmask 261120
    %v64 = vsel %vm63, %v58, -inf
    %v65 = vsel %vm63, %v59, -inf
    %v66 = vmax.f32 %v64, %v65
    %v67 = vrot.slane %v66, 4
    %v68 = vmax.f32 %v66, %v67
    %v69 = vrot.slane %v68, 2
    %v70 = vmax.f32 %v68, %v69
    %v71 = vrot.slane %v70, 1
    %v72 = vmax.f32 %v70, %v71
    %v73 = vsub.f32 %v58, %v72
    %v74 = vsub.f32 %v59, %v72
    %v75 = vmul.f32 %v73, 1.442695
    %v76 = vpow.pop %v75
    %v77 = vmul.f32 %v74, 1.442695
    %v78 = vpow.pop %v77
    %v79 = vsel %vm63, %v76, 0.0
    %v80 = vsel %vm63, %v78, 0.0
    %v81 = vadd.f32 %v79, %v80
    %v82 = vrot.slane %v81, 4
    %v83 = vadd.f32 %v81, %v82
    %v84 = vrot.slane %v83, 2
    %v85 = vadd.f32 %v83, %v84
    %v86 = vrot.slane %v85, 1
    %v87 = vadd.f32 %v85, %v86
    %vm88 = vcmp.ge.f32.partialorder %v58, %v72
    %vm89 = vcmp.ge.f32.partialorder %v59, %v72
    %v90 = vsel %vm88, %v61, 16
    %v91 = vsel %vm89, %v62, 16
    %v92 = vsel %vm63, %v90, 2147483647
    %v93 = vsel %vm63, %v91, 2147483647
    %vm94 = vcmp.lt.s32.totalorder %v92, %v93
    %v95 = vsel %vm94, %v92, %v93
    %v96 = vrot.slane %v95, 4
    %vm97 = vcmp.lt.s32.totalorder %v95, %v96
    %v98 = vsel %vm97, %v95, %v96
    %v99 = vrot.slane %v98, 2
    %vm100 = vcmp.lt.s32.totalorder %v98, %v99
    %v101 = vsel %vm100, %v98, %v99
    %v102 = vrot.slane %v101, 1
    %vm103 = vcmp.lt.s32.totalorder %v101, %v102
    %v104 = vsel %vm103, %v101, %v102
    %vm105 = vcmask 253952
    %106 = vst.msk [vmem:[#allocation7] sm:$0x1] %vm105, %v104
    %v107 = vlog2.pop %v87
    %v108 = vmul.f32 %v107, 0.6931472
    %v109 = vadd.f32 %v72, %v108
    %v110 = vsub.f32 %v72, %v109
    %111 = vst.msk [vmem:[#allocation8] sm:$0x1] %vm105, %v110
    // Predicated region
    $region18: #{tpu_custom_call.1} parent=1 // pred_check
      _
    $region19: #{tpu_custom_call.1} parent=1 // pred_check_branch
      %113 = sbr.rel (0) target = $region21
    $region20: #{tpu_custom_call.1} parent=1 // pred_region
      %s115 = ssub.s32 16, 16
      %116 = vsyncadd [#allocation4], %s115
      %s118 = sshll.u32 [#allocation7], 4
      %s119 = int_to_ptr.vmem [resolvable:$true] %s118
      %121 = dma.vmem_to_hbm [thread:$0]  %s119, 16, %s2, [#allocation4]
    $region21: #{tpu_custom_call.1} parent=1 // pred_fallthru
      _
    // Predicated region
    $region22: #{tpu_custom_call.1} parent=1 // pred_check
      _
    $region23: #{tpu_custom_call.1} parent=1 // pred_check_branch
      %123 = sbr.rel (0) target = $region25
    $region24: #{tpu_custom_call.1} parent=1 // pred_region
      %s125 = ssub.s32 16, 16
      %126 = vsyncadd [#allocation9], %s125
      %s128 = sshll.u32 [#allocation8], 4
      %s129 = int_to_ptr.vmem [resolvable:$true] %s128
      %131 = dma.vmem_to_hbm [thread:$0]  %s129, 16, %s3, [#allocation9]
    $region25: #{tpu_custom_call.1} parent=1 // pred_fallthru
      _
    // Predicated region
    $region26: #{tpu_custom_call.1} parent=1 // pred_check
      _
    $region27: #{tpu_custom_call.1} parent=1 // pred_check_branch
      %133 = sbr.rel (0) target = $region29
    $region28: #{tpu_custom_call.1} parent=1 // pred_region
      %134 = dma.done [#allocation4], 16
    $region29: #{tpu_custom_call.1} parent=1 // pred_fallthru
      _
    // Predicated region
    $region30: #{tpu_custom_call.1} parent=1 // pred_check
      _
    $region31: #{tpu_custom_call.1} parent=1 // pred_check_branch
      %136 = sbr.rel (0) target = $region33
    $region32: #{tpu_custom_call.1} parent=1 // pred_region
      %137 = dma.done [#allocation9], 16
    $region33: #{tpu_custom_call.1} parent=1 // pred_fallthru
      _
    %138 = vsyncpa [#allocation3], 1
    %139 = vsyncpa [#allocation6], 1
    %140 = vsyncpa [#allocation4], 1
    %141 = vsyncpa [#allocation9], 1

</llo_original>
